<compile_context>
chip_gen: v7x
topology: tpu7x:2x2x1
jax: 0.10.0
libtpu: 0.0.40
codegen_flags: <defaults>
</compile_context>

<pallas_src>
import jax
import jax.numpy as jnp
from jax.experimental import pallas as pl
from jax.experimental.pallas import tpu as pltpu

_LANES = 128


def _packed_gemv_kernel(x_ref, w_ref, b_ref, o_ref):
    # x_ref: (TR, 128) VMEM  w_ref: (128, P) VMEM  b_ref: (1,) SMEM  o_ref: (TR, P)
    acc = jnp.dot(x_ref[...], w_ref[...], preferred_element_type=jnp.float32)
    o_ref[...] = (acc + b_ref[0]).astype(o_ref.dtype)


def _rowsum_gemv_kernel(x_ref, w_ref, b_ref, o_ref):
    # Fallback when lane packing is not possible.
    # x_ref: (TR, F) VMEM  w_ref: (1, F) VMEM  b_ref: (1,) SMEM  o_ref: (TR, 1)
    x = x_ref[...].astype(jnp.float32)
    w = w_ref[...].astype(jnp.float32)
    acc = jnp.sum(x * w, axis=-1, keepdims=True)     # VPU mul + XLU lane reduce
    o_ref[...] = (acc + b_ref[0]).astype(o_ref.dtype)


def _round_rows(total_rows, block_rows):
    """Pick a row tile (multiple of 8 unless it spans the whole axis) and the
    padded row count it implies."""
    tr = min(block_rows, total_rows)
    if tr < total_rows:
        tr = max(8, (tr // 8) * 8)
    padded = -(-total_rows // tr) * tr
    return tr, padded


def drug_linear_regression(meta_feats, weight, bias, *, block_rows=1024):
    """meta_feats: (B, F); weight: (1, F) (PyTorch nn.Linear layout); bias: (1,).

    Returns logits of shape (B, 1), same semantics as nn.Linear(F, 1).
    """
    B, F = meta_feats.shape
    out_dtype = meta_feats.dtype
    x = meta_feats.astype(jnp.float32)
    w_row = weight.reshape(1, F).astype(jnp.float32)
    b1 = bias.reshape(1).astype(jnp.float32)

    # Lane-dense packing factor: fold P batch rows into the 128-lane axis.
    pack = F <= _LANES and _LANES % F == 0 and (_LANES // F) > 1
    compiler_params = pltpu.CompilerParams(dimension_semantics=("parallel",))

    if pack:
        P = _LANES // F
        Fp = P * F                                    # == 128
        rows = -(-B // P)                             # ceil(B / P)
        tr, rows_p = _round_rows(rows, block_rows)
        b_total = rows_p * P
        if b_total != B:
            x = jnp.pad(x, ((0, b_total - B), (0, 0)))
        xp = x.reshape(rows_p, Fp)                    # free row-major reshape
        # Block-diagonal segment weight: ws[j*F + k, j] = w[k]
        eye_p = jnp.eye(P, dtype=jnp.float32)
        ws = (eye_p[:, None, :] * w_row.reshape(1, F, 1)).reshape(Fp, P)

        out = pl.pallas_call(
            _packed_gemv_kernel,
            out_shape=jax.ShapeDtypeStruct((rows_p, P), jnp.float32),
            grid_spec=pl.GridSpec(
                grid=(rows_p // tr,),
                in_specs=[
                    pl.BlockSpec((tr, Fp), lambda i: (i, 0)),
                    pl.BlockSpec((Fp, P), lambda i: (0, 0)),
                    pl.BlockSpec(memory_space=pltpu.MemorySpace.SMEM),
                ],
                out_specs=pl.BlockSpec((tr, P), lambda i: (i, 0)),
            ),
            compiler_params=compiler_params,
        )(xp, ws, b1)
        logits = out.reshape(rows_p * P, 1)[:B]
    else:
        tr, b_padded = _round_rows(B, block_rows)
        if b_padded != B:
            x = jnp.pad(x, ((0, b_padded - B), (0, 0)))

        out = pl.pallas_call(
            _rowsum_gemv_kernel,
            out_shape=jax.ShapeDtypeStruct((b_padded, 1), jnp.float32),
            grid_spec=pl.GridSpec(
                grid=(b_padded // tr,),
                in_specs=[
                    pl.BlockSpec((tr, F), lambda i: (i, 0)),
                    pl.BlockSpec((1, F), lambda i: (0, 0)),
                    pl.BlockSpec(memory_space=pltpu.MemorySpace.SMEM),
                ],
                out_specs=pl.BlockSpec((tr, 1), lambda i: (i, 0)),
            ),
            compiler_params=compiler_params,
        )(x, w_row, b1)
        logits = out[:B]

    return logits.astype(out_dtype)


def init_params(key, num_meta_feats):
    # Deterministic init mimicking nn.Linear default: U(-1/sqrt(fan_in), +1/sqrt(fan_in))
    k_w, k_b = jax.random.split(key)
    bound = 1.0 / jnp.sqrt(jnp.maximum(num_meta_feats, 1)).astype(jnp.float32)
    weight = jax.random.uniform(k_w, (1, num_meta_feats), jnp.float32, -bound, bound)
    bias = jax.random.uniform(k_b, (1,), jnp.float32, -bound, bound)
    return weight, bias


if __name__ == "__main__":
    key = jax.random.PRNGKey(0)
    k_x, k_p, k_x2, k_x3 = jax.random.split(key, 4)

    # Small shape consistent with the module: batch=8, num_meta_feats=32.
    B, F = 8, 32
    meta_feats = jax.random.normal(k_x, (B, F), jnp.float32)
    weight, bias = init_params(k_p, F)

    logits = drug_linear_regression(meta_feats, weight, bias)
    logits = jax.block_until_ready(logits)
    ref = meta_feats @ weight.T + bias
    assert logits.shape == (B, 1)
    assert jnp.allclose(logits, ref, atol=1e-5, rtol=1e-5)

    # Exercise the padded, multi-block pipelined path (lane-packed kernel).
    x2 = jax.random.normal(k_x2, (300, F), jnp.float32)
    out2 = jax.block_until_ready(
        drug_linear_regression(x2, weight, bias, block_rows=16))
    assert out2.shape == (300, 1)
    assert jnp.allclose(out2, x2 @ weight.T + bias, atol=1e-4, rtol=1e-4)

    # Exercise the non-packable fallback (F does not divide 128 -> VPU reduce).
    F3 = 200
    w3, b3 = init_params(k_p, F3)
    x3 = jax.random.normal(k_x3, (50, F3), jnp.float32)
    out3 = jax.block_until_ready(
        drug_linear_regression(x3, w3, b3, block_rows=16))
    assert out3.shape == (50, 1)
    assert jnp.allclose(out3, x3 @ w3.T + b3, atol=1e-4, rtol=1e-4)

    print("KERNEL_OK")
</pallas_src>

<mosaic_0001>
module attributes {stable_mosaic.version = 11 : i64} {
  func.func @_packed_gemv_kernel(%arg0: i32, %arg1: memref<2x128xf32, #tpu.memory_space<vmem>>, %arg2: memref<128x4xf32, #tpu.memory_space<vmem>>, %arg3: memref<1xf32, #tpu.memory_space<smem>>, %arg4: memref<2x4xf32, #tpu.memory_space<vmem>>) attributes {dimension_semantics = [#tpu.dimension_semantics<parallel>], iteration_bounds = array<i64: 1>, scalar_prefetch = 0 : i64, scratch_operands = 0 : i64, tpu.core_type = #tpu.core_type<tc>, window_params = [{transform_indices = @transform_0, window_bounds = array<i64: 2, 128>}, {pipeline_mode = #tpu.pipeline_mode<synchronous>, transform_indices = @transform_1, window_bounds = array<i64: 128, 4>}, {transform_indices = @transform_2, window_bounds = array<i64: 1>}, {transform_indices = @transform_3, window_bounds = array<i64: 2, 4>}]} {
    %c0 = arith.constant 0 : index
    %c0_0 = arith.constant 0 : index
    %0 = vector.load %arg1[%c0, %c0_0] : memref<2x128xf32, #tpu.memory_space<vmem>>, vector<2x128xf32>
    %c0_1 = arith.constant 0 : index
    %c0_2 = arith.constant 0 : index
    %1 = vector.load %arg2[%c0_1, %c0_2] : memref<128x4xf32, #tpu.memory_space<vmem>>, vector<128x4xf32>
    %cst = arith.constant dense<0.000000e+00> : vector<2x4xf32>
    %2 = tpu.matmul %0, %1, %cst {dimension_numbers = #tpu.dot_dimension_numbers<[1], [0], [0], [1], [0, 0, 1, 1], [], []>} : vector<2x128xf32>, vector<128x4xf32>, vector<2x4xf32> -> vector<2x4xf32>
    %c0_3 = arith.constant 0 : index
    %3 = memref.load %arg3[%c0_3] : memref<1xf32, #tpu.memory_space<smem>>
    %4 = vector.broadcast %3 : f32 to vector<2x4xf32>
    %5 = arith.addf %2, %4 : vector<2x4xf32>
    %c0_4 = arith.constant 0 : index
    %c0_5 = arith.constant 0 : index
    %6 = vector.load %arg4[%c0_4, %c0_5] : memref<2x4xf32, #tpu.memory_space<vmem>>, vector<2x4xf32>
    tpu.vector_store %arg4[%c0_4, %c0_5], %5 {strides = array<i32>} : memref<2x4xf32, #tpu.memory_space<vmem>>, vector<2x4xf32>,
    return
  }
  func.func @transform_0(%arg0: i32) -> (i32, i32) {
    %c0_i32 = arith.constant 0 : i32
    %c0_i32_0 = arith.constant 0 : i32
    return %arg0, %c0_i32 : i32, i32
  }
  func.func @transform_1(%arg0: i32) -> (i32, i32) {
    %c0_i32 = arith.constant 0 : i32
    %c0_i32_0 = arith.constant 0 : i32
    %c0_i32_1 = arith.constant 0 : i32
    return %c0_i32, %c0_i32_0 : i32, i32
  }
  func.func @transform_2(%arg0: i32) -> i32 {
    %c0_i32 = arith.constant 0 : i32
    %c0_i32_0 = arith.constant 0 : i32
    return %c0_i32 : i32
  }
  func.func @transform_3(%arg0: i32) -> (i32, i32) {
    %c0_i32 = arith.constant 0 : i32
    %c0_i32_0 = arith.constant 0 : i32
    return %arg0, %c0_i32 : i32, i32
  }
}

</mosaic_0001>

<llo_original>
// kernel: tpu_custom_call.1
$region0: #{tpu_custom_call.1}
  #allocation0 [shape = 'u32[]', space=smem, size = 0x4, offset = 0x4, fixed_abs, tag = 'smem constant byte address 0x4 - core index']
  #allocation1 [shape = 'u32[144,128]{1,0:T(1,128)}', space=vmem, size = 0x12000, scoped, tag = 'internal scratch']
  #allocation2 [shape = 'f32[1]{0:T(128)S(6)}', space=smem, size = 0x200, scoped, tag = 'scoped memory for tpu_custom_call.1']
  %s0 = inlined_call_operand.vmem [shape: f32[2,128], index: 0, kind: input, shape index: {}]
  %s1 = inlined_call_operand.vmem [shape: f32[128,4], index: 1, kind: input, shape index: {}]
  %s2 = inlined_call_operand.<no memory space> [shape: f32[1], index: 2, kind: input, shape index: {}]
  %s3 = inlined_call_operand.hbm [shape: f32[2,4], index: 3, kind: output, shape index: {}]
  %s4 = sld [smem:[#allocation0]]
  $region22: #{tpu_custom_call.1} parent=0
    _
  %s6 = ssub.s32 1, %s4
  %s7 = scalar_select 0, %s6, %s4
  %8 = sst [smem:[#allocation2]] %s2
  $region1: #{tpu_custom_call.1} parent=0
    #allocation3 [shape = 'u8[1024]{0}', space=vmem, size = 0x400, scoped, tag = 'output window, operand 0, single buffered']
    #allocation4 [shape = 's32[1]{0}', space=sflag, size = 0x4, scoped, tag = 'scoped memory for tpu_custom_call.1']
    %9 = vsyncpa [#allocation4], 0
    // Predicated region
    $region2: #{tpu_custom_call.1} parent=1 // pred_check
      _
    $region3: #{tpu_custom_call.1} parent=1 // pred_check_branch
      %11 = sbr.rel (0) target = $region5
    $region4: #{tpu_custom_call.1} parent=1 // pred_region
      _
    $region5: #{tpu_custom_call.1} parent=1 // pred_fallthru
      _
    // Predicated region
    $region6: #{tpu_custom_call.1} parent=1 // pred_check
      _
    $region7: #{tpu_custom_call.1} parent=1 // pred_check_branch
      %13 = sbr.rel (0) target = $region9
    $region8: #{tpu_custom_call.1} parent=1 // pred_region
      _
    $region9: #{tpu_custom_call.1} parent=1 // pred_fallthru
      _
    // Predicated region
    $region10: #{tpu_custom_call.1} parent=1 // pred_check
      _
    $region11: #{tpu_custom_call.1} parent=1 // pred_check_branch
      %15 = sbr.rel (0) target = $region13
    $region12: #{tpu_custom_call.1} parent=1 // pred_region
      _
    $region13: #{tpu_custom_call.1} parent=1 // pred_fallthru
      _
    %v16 = vld [vmem:[%s0] sm:$0x3]
    %v17 = vld [vmem:[%s1] sm:$0xff]
    %v18 = vld [vmem:[%s1 + $0x8] sm:$0xff]
    %v19 = vld [vmem:[%s1 + $0x10] sm:$0xff]
    %v20 = vld [vmem:[%s1 + $0x18] sm:$0xff]
    %v21 = vld [vmem:[%s1 + $0x20] sm:$0xff]
    %v22 = vld [vmem:[%s1 + $0x28] sm:$0xff]
    %v23 = vld [vmem:[%s1 + $0x30] sm:$0xff]
    %v24 = vld [vmem:[%s1 + $0x38] sm:$0xff]
    %v25 = vld [vmem:[%s1 + $0x40] sm:$0xff]
    %v26 = vld [vmem:[%s1 + $0x48] sm:$0xff]
    %v27 = vld [vmem:[%s1 + $0x50] sm:$0xff]
    %v28 = vld [vmem:[%s1 + $0x58] sm:$0xff]
    %v29 = vld [vmem:[%s1 + $0x60] sm:$0xff]
    %v30 = vld [vmem:[%s1 + $0x68] sm:$0xff]
    %v31 = vld [vmem:[%s1 + $0x70] sm:$0xff]
    %v32 = vld [vmem:[%s1 + $0x78] sm:$0xff]
    %s33 = sld [smem:[#allocation2]]
    %v34 = vstv %s33
    %35 = vmatprep.subr.mxu0 0.0
    %36 = vmatpush1.msra.mxu0 %v17
    %37 = vmatprep.subr.mxu0 0.0
    %38 = vmatpush1.msra.mxu0 %v18
    %39 = vmatprep.subr.mxu0 0.0
    %40 = vmatpush1.msra.mxu0 %v19
    %41 = vmatprep.subr.mxu0 0.0
    %42 = vmatpush1.msra.mxu0 %v20
    %43 = vmatprep.subr.mxu0 0.0
    %44 = vmatpush1.msra.mxu0 %v21
    %45 = vmatprep.subr.mxu0 0.0
    %46 = vmatpush1.msra.mxu0 %v22
    %47 = vmatprep.subr.mxu0 0.0
    %48 = vmatpush1.msra.mxu0 %v23
    %49 = vmatprep.subr.mxu0 0.0
    %50 = vmatpush1.msra.mxu0 %v24
    %51 = vmatprep.subr.mxu0 0.0
    %52 = vmatpush1.msra.mxu0 %v25
    %53 = vmatprep.subr.mxu0 0.0
    %54 = vmatpush1.msra.mxu0 %v26
    %55 = vmatprep.subr.mxu0 0.0
    %56 = vmatpush1.msra.mxu0 %v27
    %57 = vmatprep.subr.mxu0 0.0
    %58 = vmatpush1.msra.mxu0 %v28
    %59 = vmatprep.subr.mxu0 0.0
    %60 = vmatpush1.msra.mxu0 %v29
    %61 = vmatprep.subr.mxu0 0.0
    %62 = vmatpush1.msra.mxu0 %v30
    %63 = vmatprep.subr.mxu0 0.0
    %64 = vmatpush1.msra.mxu0 %v31
    %65 = vmatprep.subr.mxu0 0.0
    %66 = vmatpush1.msra.mxu0 %v32
    %67 = vmatprep.subr.mxu0 0.0
    %68 = vmatpush1.msra.mxu0 0.0
    %69 = vmatprep.subr.mxu0 0.0
    %70 = vmatpush1.msra.mxu0 0.0
    %71 = vmatprep.subr.mxu0 0.0
    %72 = vmatpush1.msra.mxu0 0.0
    %73 = vmatprep.subr.mxu0 0.0
    %74 = vmatpush1.msra.mxu0 0.0
    %75 = vmatprep.subr.mxu0 0.0
    %76 = vmatpush1.msra.mxu0 0.0
    %77 = vmatprep.subr.mxu0 0.0
    %78 = vmatpush1.msra.mxu0 0.0
    %79 = vmatprep.subr.mxu0 0.0
    %80 = vmatpush1.msra.mxu0 0.0
    %81 = vmatprep.subr.mxu0 0.0
    %82 = vmatpush1.msra.mxu0 0.0
    %83 = vmatprep.subr.mxu0 0.0
    %84 = vmatpush1.msra.mxu0 0.0
    %85 = vmatprep.subr.mxu0 0.0
    %86 = vmatpush1.msra.mxu0 0.0
    %87 = vmatprep.subr.mxu0 0.0
    %88 = vmatpush1.msra.mxu0 0.0
    %89 = vmatprep.subr.mxu0 0.0
    %90 = vmatpush1.msra.mxu0 0.0
    %91 = vmatprep.subr.mxu0 0.0
    %92 = vmatpush1.msra.mxu0 0.0
    %93 = vmatprep.subr.mxu0 0.0
    %94 = vmatpush1.msra.mxu0 0.0
    %95 = vmatprep.subr.mxu0 0.0
    %96 = vmatpush1.msra.mxu0 0.0
    %97 = vmatprep.subr.mxu0 0.0
    %98 = vmatpush1.msra.mxu0 0.0
    %99 = vmatprep.mubr.f32.mxu0 0.0
    %100 = vmatmul.mubr.f32.gmra.mrb[0].mxu0 %v16
    %v101 = vpop.f32.mrb[0].mxu0
    %v102 = vadd.f32 %v34, %v101
    %v103 = vpop.f32.mrb[0].mxu0
    %104 = vdwg.mxu0
    %vm105 = vcmask 25600
    %106 = vst.msk [vmem:[#allocation3] sm:$0x3] %vm105, %v102
    // Predicated region
    $region14: #{tpu_custom_call.1} parent=1 // pred_check
      _
    $region15: #{tpu_custom_call.1} parent=1 // pred_check_branch
      %108 = sbr.rel (0) target = $region17
    $region16: #{tpu_custom_call.1} parent=1 // pred_region
      %s110 = ssub.s32 32, 32
      %111 = vsyncadd [#allocation4], %s110
      %s113 = sshll.u32 [#allocation3], 4
      %s114 = int_to_ptr.vmem [resolvable:$true] %s113
      %116 = dma.vmem_to_hbm [thread:$0]  %s114, 32, %s3, [#allocation4]
    $region17: #{tpu_custom_call.1} parent=1 // pred_fallthru
      _
    // Predicated region
    $region18: #{tpu_custom_call.1} parent=1 // pred_check
      _
    $region19: #{tpu_custom_call.1} parent=1 // pred_check_branch
      %118 = sbr.rel (0) target = $region21
    $region20: #{tpu_custom_call.1} parent=1 // pred_region
      %119 = dma.done [#allocation4], 32
    $region21: #{tpu_custom_call.1} parent=1 // pred_fallthru
      _
    %120 = vsyncpa [#allocation4], 1

</llo_original>
